<compile_context>
chip_gen: v7x
topology: tpu7x:2x2x1
jax: 0.10.0
libtpu: 0.0.40
codegen_flags: <defaults>
</compile_context>

<pallas_src>
import functools

import jax
import jax.numpy as jnp
from jax.experimental import pallas as pl
from jax.experimental.pallas import tpu as pltpu


_LANE = 128   # lane width (last dim) for dense vregs / MXU
_SUBLANE = 8  # f32 sublane granularity


def _round_up(x: int, m: int) -> int:
    return ((x + m - 1) // m) * m


def _learn_text_kernel(x_ref, w1_ref, b1_ref, w2_ref, b2_ref, o_ref, *, eps):
    # ---- Linear1 + ReLU (MXU matmul, f32 accumulate, f32 epilogue) ----
    h = jnp.dot(x_ref[...], w1_ref[...], preferred_element_type=jnp.float32)
    h = jnp.maximum(h + b1_ref[...], 0.0)

    # ---- Linear2 + Tanh (tanh goes to the EUP slot) ----
    z = jnp.dot(h.astype(w2_ref.dtype), w2_ref[...],
                preferred_element_type=jnp.float32)
    z = jnp.tanh(z + b2_ref[...])

    # ---- Row-wise L2 normalization with eps clamp (padded cols are 0) ----
    ss = jnp.sum(z * z, axis=-1, keepdims=True)           # (TM, 1) via XLU
    nrm = jnp.maximum(jnp.sqrt(ss), eps)
    inv = 1.0 / nrm                                        # TM divides, not TM*N
    o_ref[...] = (z * inv).astype(o_ref.dtype)


def _pick_block_rows(B, k_pad, n_pad, itemsize, requested, vmem_budget):
    """Largest batch tile <= requested whose working set fits the VMEM budget."""
    tm = min(requested, _round_up(B, _SUBLANE))
    tm = _round_up(tm, _SUBLANE)
    resident = (k_pad * n_pad + n_pad * n_pad) * itemsize + 2 * n_pad * 4
    while tm > _SUBLANE:
        # 2x buffers for streaming x tile and out tile + f32 intermediates.
        streaming = 2 * tm * (k_pad + n_pad) * itemsize
        work = 2 * tm * n_pad * 4
        if resident + streaming + work <= vmem_budget:
            break
        tm //= 2
        tm = max(_SUBLANE, _round_up(tm, _SUBLANE))
    return tm


def learn_text_forward(x, w1, b1, w2, b2, *, eps=1e-12, block_rows=512):
    """Fused LearnText forward.

    x:  (B, text_dim)
    w1: (text_dim, emb_dim)   (pre-transposed vs. PyTorch (out, in))
    b1: (emb_dim,)
    w2: (emb_dim, emb_dim)    (pre-transposed)
    b2: (emb_dim,)
    returns (B, emb_dim), L2-normalized per row.
    """
    B, text_dim = x.shape
    emb_dim = w1.shape[1]
    assert w1.shape == (text_dim, emb_dim)
    assert w2.shape == (emb_dim, emb_dim)
    assert b1.shape == (emb_dim,) and b2.shape == (emb_dim,)

    dt = x.dtype
    itemsize = jnp.dtype(dt).itemsize

    # Lane-dense feature dims; batch tiled in multiples of the sublane width.
    k_pad = _round_up(text_dim, _LANE)
    n_pad = _round_up(emb_dim, _LANE)
    vmem_budget = 24 << 20  # stay under the 32 MiB default scoped-VMEM limit
    tm = _pick_block_rows(B, k_pad, n_pad, itemsize, block_rows, vmem_budget)
    b_pad = _round_up(B, tm)

    x_p = jnp.pad(x, ((0, b_pad - B), (0, k_pad - text_dim)))
    w1_p = jnp.pad(w1, ((0, k_pad - text_dim), (0, n_pad - emb_dim))).astype(dt)
    w2_p = jnp.pad(w2, ((0, n_pad - emb_dim), (0, n_pad - emb_dim))).astype(dt)
    # Bias stays f32 so the epilogue add is done at full precision.
    b1_p = jnp.pad(b1, (0, n_pad - emb_dim)).reshape(1, n_pad).astype(jnp.float32)
    b2_p = jnp.pad(b2, (0, n_pad - emb_dim)).reshape(1, n_pad).astype(jnp.float32)

    grid = (b_pad // tm,)
    cost = pl.CostEstimate(
        flops=2 * b_pad * k_pad * n_pad + 2 * b_pad * n_pad * n_pad,
        transcendentals=b_pad * n_pad + b_pad,  # tanh + per-row sqrt
        bytes_accessed=(x_p.size + w1_p.size + w2_p.size) * itemsize
        + (b1_p.size + b2_p.size) * 4
        + b_pad * n_pad * itemsize,
    )

    out = pl.pallas_call(
        functools.partial(_learn_text_kernel, eps=eps),
        out_shape=jax.ShapeDtypeStruct((b_pad, n_pad), dt),
        grid_spec=pltpu.PrefetchScalarGridSpec(
            num_scalar_prefetch=0,
            grid=grid,
            in_specs=[
                # Streaming: one batch tile per grid step (double-buffered).
                pl.BlockSpec((tm, k_pad), lambda i: (i, 0)),
                # Resident parameters: same block for every grid step.
                pl.BlockSpec((k_pad, n_pad), lambda i: (0, 0)),
                pl.BlockSpec((1, n_pad), lambda i: (0, 0)),
                pl.BlockSpec((n_pad, n_pad), lambda i: (0, 0)),
                pl.BlockSpec((1, n_pad), lambda i: (0, 0)),
            ],
            out_specs=pl.BlockSpec((tm, n_pad), lambda i: (i, 0)),
        ),
        compiler_params=pltpu.CompilerParams(
            dimension_semantics=("parallel",),  # independent batch tiles
        ),
        cost_estimate=cost,
    )(x_p, w1_p, b1_p, w2_p, b2_p)

    # Strip batch / lane padding added for alignment.
    return out[:B, :emb_dim]


if __name__ == "__main__":
    # Small shapes consistent with the module: text_dim=64, emb_dim=32, batch=2.
    batch, text_dim, emb_dim = 2, 64, 32

    key = jax.random.PRNGKey(0)
    kx, kw1, kb1, kw2, kb2 = jax.random.split(key, 5)

    x = jax.random.normal(kx, (batch, text_dim), dtype=jnp.float32)

    bound1 = 1.0 / jnp.sqrt(float(text_dim))
    w1 = jax.random.uniform(kw1, (text_dim, emb_dim), minval=-bound1,
                            maxval=bound1, dtype=jnp.float32)
    b1 = jax.random.uniform(kb1, (emb_dim,), minval=-bound1, maxval=bound1,
                            dtype=jnp.float32)
    bound2 = 1.0 / jnp.sqrt(float(emb_dim))
    w2 = jax.random.uniform(kw2, (emb_dim, emb_dim), minval=-bound2,
                            maxval=bound2, dtype=jnp.float32)
    b2 = jax.random.uniform(kb2, (emb_dim,), minval=-bound2, maxval=bound2,
                            dtype=jnp.float32)

    out = learn_text_forward(x, w1, b1, w2, b2)
    jax.block_until_ready(out)

    # Pure-JAX reference of the PyTorch forward.
    h_ref = jnp.maximum(x @ w1 + b1, 0.0)              # Linear1 + Flatten + ReLU
    z_ref = jnp.tanh(h_ref @ w2 + b2)                  # Linear2 + Tanh
    nrm = jnp.maximum(jnp.sqrt(jnp.sum(z_ref * z_ref, axis=1, keepdims=True)),
                      1e-12)
    ref = z_ref / nrm                                   # Norm (p=2, dim=1)

    assert out.shape == (batch, emb_dim)
    assert jnp.allclose(out, ref, atol=1e-5, rtol=1e-5)

    print("KERNEL_OK")
</pallas_src>

<mosaic_0001>
module attributes {stable_mosaic.version = 11 : i64} {
  func.func @_learn_text_kernel(%arg0: i32, %arg1: memref<8x128xf32, #tpu.memory_space<vmem>>, %arg2: memref<128x128xf32, #tpu.memory_space<vmem>>, %arg3: memref<1x128xf32, #tpu.memory_space<vmem>>, %arg4: memref<128x128xf32, #tpu.memory_space<vmem>>, %arg5: memref<1x128xf32, #tpu.memory_space<vmem>>, %arg6: memref<8x128xf32, #tpu.memory_space<vmem>>) attributes {dimension_semantics = [#tpu.dimension_semantics<parallel>], iteration_bounds = array<i64: 1>, scalar_prefetch = 0 : i64, scratch_operands = 0 : i64, tpu.core_type = #tpu.core_type<tc>, window_params = [{transform_indices = @transform_0, window_bounds = array<i64: 8, 128>}, {pipeline_mode = #tpu.pipeline_mode<synchronous>, transform_indices = @transform_1, window_bounds = array<i64: 128, 128>}, {pipeline_mode = #tpu.pipeline_mode<synchronous>, transform_indices = @transform_2, window_bounds = array<i64: 1, 128>}, {pipeline_mode = #tpu.pipeline_mode<synchronous>, transform_indices = @transform_3, window_bounds = array<i64: 128, 128>}, {pipeline_mode = #tpu.pipeline_mode<synchronous>, transform_indices = @transform_4, window_bounds = array<i64: 1, 128>}, {transform_indices = @transform_5, window_bounds = array<i64: 8, 128>}]} {
    %c0 = arith.constant 0 : index
    %c0_0 = arith.constant 0 : index
    %0 = vector.load %arg1[%c0, %c0_0] : memref<8x128xf32, #tpu.memory_space<vmem>>, vector<8x128xf32>
    %c0_1 = arith.constant 0 : index
    %c0_2 = arith.constant 0 : index
    %1 = vector.load %arg2[%c0_1, %c0_2] : memref<128x128xf32, #tpu.memory_space<vmem>>, vector<128x128xf32>
    %cst = arith.constant dense<0.000000e+00> : vector<8x128xf32>
    %2 = tpu.matmul %0, %1, %cst {dimension_numbers = #tpu.dot_dimension_numbers<[1], [0], [0], [1], [0, 0, 1, 1], [], []>} : vector<8x128xf32>, vector<128x128xf32>, vector<8x128xf32> -> vector<8x128xf32>
    %c0_3 = arith.constant 0 : index
    %c0_4 = arith.constant 0 : index
    %3 = vector.load %arg3[%c0_3, %c0_4] : memref<1x128xf32, #tpu.memory_space<vmem>>, vector<1x128xf32>
    %4 = vector.broadcast %3 : vector<1x128xf32> to vector<8x128xf32>
    %5 = arith.addf %2, %4 : vector<8x128xf32>
    %cst_5 = arith.constant 0.000000e+00 : f32
    %6 = vector.broadcast %cst_5 : f32 to vector<8x128xf32>
    %7 = arith.maximumf %5, %6 : vector<8x128xf32>
    %c0_6 = arith.constant 0 : index
    %c0_7 = arith.constant 0 : index
    %8 = vector.load %arg4[%c0_6, %c0_7] : memref<128x128xf32, #tpu.memory_space<vmem>>, vector<128x128xf32>
    %cst_8 = arith.constant dense<0.000000e+00> : vector<8x128xf32>
    %9 = tpu.matmul %7, %8, %cst_8 {dimension_numbers = #tpu.dot_dimension_numbers<[1], [0], [0], [1], [0, 0, 1, 1], [], []>} : vector<8x128xf32>, vector<128x128xf32>, vector<8x128xf32> -> vector<8x128xf32>
    %c0_9 = arith.constant 0 : index
    %c0_10 = arith.constant 0 : index
    %10 = vector.load %arg5[%c0_9, %c0_10] : memref<1x128xf32, #tpu.memory_space<vmem>>, vector<1x128xf32>
    %11 = vector.broadcast %10 : vector<1x128xf32> to vector<8x128xf32>
    %12 = arith.addf %9, %11 : vector<8x128xf32>
    %13 = math.tanh %12 : vector<8x128xf32>
    %14 = arith.mulf %13, %13 : vector<8x128xf32>
    %cst_11 = arith.constant dense<0.000000e+00> : vector<8xf32>
    %15 = vector.multi_reduction <add>, %14, %cst_11 [1] : vector<8x128xf32> to vector<8xf32>
    %16 = vector.shape_cast %15 : vector<8xf32> to vector<8x1xf32>
    %17 = math.sqrt %16 : vector<8x1xf32>
    %cst_12 = arith.constant 9.99999996E-13 : f32
    %18 = vector.broadcast %cst_12 : f32 to vector<8x1xf32>
    %19 = arith.maximumf %17, %18 : vector<8x1xf32>
    %cst_13 = arith.constant 1.000000e+00 : f32
    %20 = vector.broadcast %cst_13 : f32 to vector<8x1xf32>
    %21 = arith.divf %20, %19 : vector<8x1xf32>
    %22 = vector.broadcast %21 : vector<8x1xf32> to vector<8x128xf32>
    %23 = arith.mulf %13, %22 : vector<8x128xf32>
    %c0_14 = arith.constant 0 : index
    %c0_15 = arith.constant 0 : index
    %24 = vector.load %arg6[%c0_14, %c0_15] : memref<8x128xf32, #tpu.memory_space<vmem>>, vector<8x128xf32>
    tpu.vector_store %arg6[%c0_14, %c0_15], %23 {strides = array<i32>} : memref<8x128xf32, #tpu.memory_space<vmem>>, vector<8x128xf32>,
    return
  }
  func.func @transform_0(%arg0: i32) -> (i32, i32) {
    %c0_i32 = arith.constant 0 : i32
    %c0_i32_0 = arith.constant 0 : i32
    return %arg0, %c0_i32 : i32, i32
  }
  func.func @transform_1(%arg0: i32) -> (i32, i32) {
    %c0_i32 = arith.constant 0 : i32
    %c0_i32_0 = arith.constant 0 : i32
    %c0_i32_1 = arith.constant 0 : i32
    return %c0_i32, %c0_i32_0 : i32, i32
  }
  func.func @transform_2(%arg0: i32) -> (i32, i32) {
    %c0_i32 = arith.constant 0 : i32
    %c0_i32_0 = arith.constant 0 : i32
    %c0_i32_1 = arith.constant 0 : i32
    return %c0_i32, %c0_i32_0 : i32, i32
  }
  func.func @transform_3(%arg0: i32) -> (i32, i32) {
    %c0_i32 = arith.constant 0 : i32
    %c0_i32_0 = arith.constant 0 : i32
    %c0_i32_1 = arith.constant 0 : i32
    return %c0_i32, %c0_i32_0 : i32, i32
  }
  func.func @transform_4(%arg0: i32) -> (i32, i32) {
    %c0_i32 = arith.constant 0 : i32
    %c0_i32_0 = arith.constant 0 : i32
    %c0_i32_1 = arith.constant 0 : i32
    return %c0_i32, %c0_i32_0 : i32, i32
  }
  func.func @transform_5(%arg0: i32) -> (i32, i32) {
    %c0_i32 = arith.constant 0 : i32
    %c0_i32_0 = arith.constant 0 : i32
    return %arg0, %c0_i32 : i32, i32
  }
}

</mosaic_0001>

<llo_original>
// kernel: tpu_custom_call.1
$region0: #{tpu_custom_call.1}
  #allocation0 [shape = 'u32[]', space=smem, size = 0x4, offset = 0x4, fixed_abs, tag = 'smem constant byte address 0x4 - core index']
  #allocation1 [shape = 'u32[144,128]{1,0:T(1,128)}', space=vmem, size = 0x12000, scoped, tag = 'internal scratch']
  %s0 = inlined_call_operand.hbm [shape: f32[8,128], index: 0, kind: input, shape index: {}]
  %s1 = inlined_call_operand.hbm [shape: f32[128,128], index: 1, kind: input, shape index: {}]
  %s2 = inlined_call_operand.vmem [shape: f32[1,128], index: 2, kind: input, shape index: {}]
  %s3 = inlined_call_operand.hbm [shape: f32[128,128], index: 3, kind: input, shape index: {}]
  %s4 = inlined_call_operand.vmem [shape: f32[1,128], index: 4, kind: input, shape index: {}]
  %s5 = inlined_call_operand.hbm [shape: f32[8,128], index: 5, kind: output, shape index: {}]
  %s6 = sld [smem:[#allocation0]]
  $region42: #{tpu_custom_call.1} parent=0
    _
  %s8 = ssub.s32 1, %s6
  %s9 = scalar_select 0, %s8, %s6
  $region1: #{tpu_custom_call.1} parent=0
    #allocation2 [shape = 'u8[4096]{0}', space=vmem, size = 0x1000, scoped, tag = 'input window, operand 0, single buffered']
    #allocation3 [shape = 's32[1]{0}', space=sflag, size = 0x4, scoped, tag = 'scoped memory for tpu_custom_call.1']
    #allocation4 [shape = 's32[1]{0}', space=sflag, size = 0x4, scoped, tag = 'scoped memory for tpu_custom_call.1']
    #allocation5 [shape = 'u8[65536]{0}', space=vmem, size = 0x10000, scoped, tag = 'input window, operand 1, single buffered']
    #allocation6 [shape = 's32[1]{0}', space=sflag, size = 0x4, scoped, tag = 'scoped memory for tpu_custom_call.1']
    #allocation7 [shape = 'u8[65536]{0}', space=vmem, size = 0x10000, scoped, tag = 'input window, operand 3, single buffered']
    #allocation8 [shape = 'u8[4096]{0}', space=vmem, size = 0x1000, scoped, tag = 'output window, operand 0, single buffered']
    %10 = vsyncpa [#allocation3], 0
    %11 = vsyncpa [#allocation6], 0
    %12 = vsyncpa [#allocation4], 0
    // Predicated region
    $region2: #{tpu_custom_call.1} parent=1 // pred_check
      _
    $region3: #{tpu_custom_call.1} parent=1 // pred_check_branch
      %14 = sbr.rel (0) target = $region5
    $region4: #{tpu_custom_call.1} parent=1 // pred_region
      %s16 = ssub.s32 128, 128
      %17 = vsyncadd [#allocation3], %s16
      %s19 = sshll.u32 [#allocation2], 4
      %s20 = int_to_ptr.vmem [resolvable:$true] %s19
      %22 = dma.hbm_to_vmem [thread:$0]  %s0, 128, %s20, [#allocation3]
    $region5: #{tpu_custom_call.1} parent=1 // pred_fallthru
      _
    // Predicated region
    $region6: #{tpu_custom_call.1} parent=1 // pred_check
      _
    $region7: #{tpu_custom_call.1} parent=1 // pred_check_branch
      %24 = sbr.rel (0) target = $region9
    $region8: #{tpu_custom_call.1} parent=1 // pred_region
      %s26 = ssub.s32 2048, 2048
      %27 = vsyncadd [#allocation6], %s26
      %s28 = sshll.u32 [#allocation5], 4
      %s29 = int_to_ptr.vmem [resolvable:$true] %s28
      %34 = dma.hbm_to_vmem [thread:$0]  %s1, 2048, %s29, [#allocation6], 128, 128, 8
    $region9: #{tpu_custom_call.1} parent=1 // pred_fallthru
      _
    // Predicated region
    $region10: #{tpu_custom_call.1} parent=1 // pred_check
      _
    $region11: #{tpu_custom_call.1} parent=1 // pred_check_branch
      %36 = sbr.rel (0) target = $region13
    $region12: #{tpu_custom_call.1} parent=1 // pred_region
      _
    $region13: #{tpu_custom_call.1} parent=1 // pred_fallthru
      _
    // Predicated region
    $region14: #{tpu_custom_call.1} parent=1 // pred_check
      _
    $region15: #{tpu_custom_call.1} parent=1 // pred_check_branch
      %38 = sbr.rel (0) target = $region17
    $region16: #{tpu_custom_call.1} parent=1 // pred_region
      %s40 = ssub.s32 2048, 2048
      %41 = vsyncadd [#allocation6], %s40
      %s42 = sshll.u32 [#allocation7], 4
      %s43 = int_to_ptr.vmem [resolvable:$true] %s42
      %48 = dma.hbm_to_vmem [thread:$0]  %s3, 2048, %s43, [#allocation6], 128, 128, 8
    $region17: #{tpu_custom_call.1} parent=1 // pred_fallthru
      _
    // Predicated region
    $region18: #{tpu_custom_call.1} parent=1 // pred_check
      _
    $region19: #{tpu_custom_call.1} parent=1 // pred_check_branch
      %50 = sbr.rel (0) target = $region21
    $region20: #{tpu_custom_call.1} parent=1 // pred_region
      _
    $region21: #{tpu_custom_call.1} parent=1 // pred_fallthru
      _
    // Predicated region
    $region22: #{tpu_custom_call.1} parent=1 // pred_check
      _
    $region23: #{tpu_custom_call.1} parent=1 // pred_check_branch
      %52 = sbr.rel (0) target = $region25
    $region24: #{tpu_custom_call.1} parent=1 // pred_region
      %53 = dma.done [#allocation3], 128
    $region25: #{tpu_custom_call.1} parent=1 // pred_fallthru
      _
    // Predicated region
    $region26: #{tpu_custom_call.1} parent=1 // pred_check
      _
    $region27: #{tpu_custom_call.1} parent=1 // pred_check_branch
      %55 = sbr.rel (0) target = $region29
    $region28: #{tpu_custom_call.1} parent=1 // pred_region
      %56 = dma.done [#allocation6], 2048
    $region29: #{tpu_custom_call.1} parent=1 // pred_fallthru
      _
    // Predicated region
    $region30: #{tpu_custom_call.1} parent=1 // pred_check
      _
    $region31: #{tpu_custom_call.1} parent=1 // pred_check_branch
      %58 = sbr.rel (0) target = $region33
    $region32: #{tpu_custom_call.1} parent=1 // pred_region
      %59 = dma.done [#allocation6], 2048
    $region33: #{tpu_custom_call.1} parent=1 // pred_fallthru
      _
    %v60 = vld [vmem:[#allocation2] sm:$0xff]
    %v61 = vld [vmem:[#allocation5] sm:$0xff]
    %v62 = vld [vmem:[#allocation5 + $0x8] sm:$0xff]
    %v63 = vld [vmem:[#allocation5 + $0x10] sm:$0xff]
    %v64 = vld [vmem:[#allocation5 + $0x18] sm:$0xff]
    %v65 = vld [vmem:[#allocation5 + $0x20] sm:$0xff]
    %v66 = vld [vmem:[#allocation5 + $0x28] sm:$0xff]
    %v67 = vld [vmem:[#allocation5 + $0x30] sm:$0xff]
    %v68 = vld [vmem:[#allocation5 + $0x38] sm:$0xff]
    %v69 = vld [vmem:[#allocation5 + $0x40] sm:$0xff]
    %v70 = vld [vmem:[#allocation5 + $0x48] sm:$0xff]
    %v71 = vld [vmem:[#allocation5 + $0x50] sm:$0xff]
    %v72 = vld [vmem:[#allocation5 + $0x58] sm:$0xff]
    %v73 = vld [vmem:[#allocation5 + $0x60] sm:$0xff]
    %v74 = vld [vmem:[#allocation5 + $0x68] sm:$0xff]
    %v75 = vld [vmem:[#allocation5 + $0x70] sm:$0xff]
    %v76 = vld [vmem:[#allocation5 + $0x78] sm:$0xff]
    %v77 = vld [vmem:[%s2] sm:$0x1]
    %v79 = vlaneseq
    %v80 = vshrl.u32 %v79, 7
    %v81 = vsub.s32 0, %v80
    %v82 = vrot.slane %v77, %v81
    %84 = vmatprep.subr.mxu0 0.0
    %85 = vmatpush1.msra.mxu0 %v61
    %86 = vmatprep.subr.mxu0 0.0
    %87 = vmatpush1.msra.mxu0 %v62
    %88 = vmatprep.subr.mxu0 0.0
    %89 = vmatpush1.msra.mxu0 %v63
    %90 = vmatprep.subr.mxu0 0.0
    %91 = vmatpush1.msra.mxu0 %v64
    %92 = vmatprep.subr.mxu0 0.0
    %93 = vmatpush1.msra.mxu0 %v65
    %94 = vmatprep.subr.mxu0 0.0
    %95 = vmatpush1.msra.mxu0 %v66
    %96 = vmatprep.subr.mxu0 0.0
    %97 = vmatpush1.msra.mxu0 %v67
    %98 = vmatprep.subr.mxu0 0.0
    %99 = vmatpush1.msra.mxu0 %v68
    %100 = vmatprep.subr.mxu0 0.0
    %101 = vmatpush1.msra.mxu0 %v69
    %102 = vmatprep.subr.mxu0 0.0
    %103 = vmatpush1.msra.mxu0 %v70
    %104 = vmatprep.subr.mxu0 0.0
    %105 = vmatpush1.msra.mxu0 %v71
    %106 = vmatprep.subr.mxu0 0.0
    %107 = vmatpush1.msra.mxu0 %v72
    %108 = vmatprep.subr.mxu0 0.0
    %109 = vmatpush1.msra.mxu0 %v73
    %110 = vmatprep.subr.mxu0 0.0
    %111 = vmatpush1.msra.mxu0 %v74
    %112 = vmatprep.subr.mxu0 0.0
    %113 = vmatpush1.msra.mxu0 %v75
    %114 = vmatprep.subr.mxu0 0.0
    %115 = vmatpush1.msra.mxu0 %v76
    %116 = vmatprep.subr.mxu0 0.0
    %117 = vmatpush1.msra.mxu0 0.0
    %118 = vmatprep.subr.mxu0 0.0
    %119 = vmatpush1.msra.mxu0 0.0
    %120 = vmatprep.subr.mxu0 0.0
    %121 = vmatpush1.msra.mxu0 0.0
    %122 = vmatprep.subr.mxu0 0.0
    %123 = vmatpush1.msra.mxu0 0.0
    %124 = vmatprep.subr.mxu0 0.0
    %125 = vmatpush1.msra.mxu0 0.0
    %126 = vmatprep.subr.mxu0 0.0
    %127 = vmatpush1.msra.mxu0 0.0
    %128 = vmatprep.subr.mxu0 0.0
    %129 = vmatpush1.msra.mxu0 0.0
    %130 = vmatprep.subr.mxu0 0.0
    %131 = vmatpush1.msra.mxu0 0.0
    %132 = vmatprep.subr.mxu0 0.0
    %133 = vmatpush1.msra.mxu0 0.0
    %134 = vmatprep.subr.mxu0 0.0
    %135 = vmatpush1.msra.mxu0 0.0
    %136 = vmatprep.subr.mxu0 0.0
    %137 = vmatpush1.msra.mxu0 0.0
    %138 = vmatprep.subr.mxu0 0.0
    %139 = vmatpush1.msra.mxu0 0.0
    %140 = vmatprep.subr.mxu0 0.0
    %141 = vmatpush1.msra.mxu0 0.0
    %142 = vmatprep.subr.mxu0 0.0
    %143 = vmatpush1.msra.mxu0 0.0
    %144 = vmatprep.subr.mxu0 0.0
    %145 = vmatpush1.msra.mxu0 0.0
    %146 = vmatprep.subr.mxu0 0.0
    %147 = vmatpush1.msra.mxu0 0.0
    %148 = vmatprep.mubr.f32.mxu0 0.0
    %149 = vmatmul.mubr.f32.gmra.mrb[0].mxu0 %v60
    %v150 = vpop.f32.mrb[0].mxu0
    %v151 = vadd.f32 %v82, %v150
    %v152 = vpop.f32.mrb[0].mxu0
    %153 = vdwg.mxu0
    %v154 = vmax.f32 %v151, 0.0
    %v155 = vld [vmem:[#allocation7] sm:$0xff]
    %v156 = vld [vmem:[#allocation7 + $0x8] sm:$0xff]
    %v157 = vld [vmem:[#allocation7 + $0x10] sm:$0xff]
    %v158 = vld [vmem:[#allocation7 + $0x18] sm:$0xff]
    %v159 = vld [vmem:[#allocation7 + $0x20] sm:$0xff]
    %v160 = vld [vmem:[#allocation7 + $0x28] sm:$0xff]
    %v161 = vld [vmem:[#allocation7 + $0x30] sm:$0xff]
    %v162 = vld [vmem:[#allocation7 + $0x38] sm:$0xff]
    %v163 = vld [vmem:[#allocation7 + $0x40] sm:$0xff]
    %v164 = vld [vmem:[#allocation7 + $0x48] sm:$0xff]
    %v165 = vld [vmem:[#allocation7 + $0x50] sm:$0xff]
    %v166 = vld [vmem:[#allocation7 + $0x58] sm:$0xff]
    %v167 = vld [vmem:[#allocation7 + $0x60] sm:$0xff]
    %v168 = vld [vmem:[#allocation7 + $0x68] sm:$0xff]
    %v169 = vld [vmem:[#allocation7 + $0x70] sm:$0xff]
    %v170 = vld [vmem:[#allocation7 + $0x78] sm:$0xff]
    %v171 = vld [vmem:[%s4] sm:$0x1]
    %v173 = vlaneseq
    %v174 = vshrl.u32 %v173, 7
    %v175 = vsub.s32 0, %v174
    %v176 = vrot.slane %v171, %v175
    %178 = vmatprep.subr.mxu0 0.0
    %179 = vmatpush1.msra.mxu0 %v155
    %180 = vmatprep.subr.mxu0 0.0
    %181 = vmatpush1.msra.mxu0 %v156
    %182 = vmatprep.subr.mxu0 0.0
    %183 = vmatpush1.msra.mxu0 %v157
    %184 = vmatprep.subr.mxu0 0.0
    %185 = vmatpush1.msra.mxu0 %v158
    %186 = vmatprep.subr.mxu0 0.0
    %187 = vmatpush1.msra.mxu0 %v159
    %188 = vmatprep.subr.mxu0 0.0
    %189 = vmatpush1.msra.mxu0 %v160
    %190 = vmatprep.subr.mxu0 0.0
    %191 = vmatpush1.msra.mxu0 %v161
    %192 = vmatprep.subr.mxu0 0.0
    %193 = vmatpush1.msra.mxu0 %v162
    %194 = vmatprep.subr.mxu0 0.0
    %195 = vmatpush1.msra.mxu0 %v163
    %196 = vmatprep.subr.mxu0 0.0
    %197 = vmatpush1.msra.mxu0 %v164
    %198 = vmatprep.subr.mxu0 0.0
    %199 = vmatpush1.msra.mxu0 %v165
    %200 = vmatprep.subr.mxu0 0.0
    %201 = vmatpush1.msra.mxu0 %v166
    %202 = vmatprep.subr.mxu0 0.0
    %203 = vmatpush1.msra.mxu0 %v167
    %204 = vmatprep.subr.mxu0 0.0
    %205 = vmatpush1.msra.mxu0 %v168
    %206 = vmatprep.subr.mxu0 0.0
    %207 = vmatpush1.msra.mxu0 %v169
    %208 = vmatprep.subr.mxu0 0.0
    %209 = vmatpush1.msra.mxu0 %v170
    %210 = vmatprep.subr.mxu0 0.0
    %211 = vmatpush1.msra.mxu0 0.0
    %212 = vmatprep.subr.mxu0 0.0
    %213 = vmatpush1.msra.mxu0 0.0
    %214 = vmatprep.subr.mxu0 0.0
    %215 = vmatpush1.msra.mxu0 0.0
    %216 = vmatprep.subr.mxu0 0.0
    %217 = vmatpush1.msra.mxu0 0.0
    %218 = vmatprep.subr.mxu0 0.0
    %219 = vmatpush1.msra.mxu0 0.0
    %220 = vmatprep.subr.mxu0 0.0
    %221 = vmatpush1.msra.mxu0 0.0
    %222 = vmatprep.subr.mxu0 0.0
    %223 = vmatpush1.msra.mxu0 0.0
    %224 = vmatprep.subr.mxu0 0.0
    %225 = vmatpush1.msra.mxu0 0.0
    %226 = vmatprep.subr.mxu0 0.0
    %227 = vmatpush1.msra.mxu0 0.0
    %228 = vmatprep.subr.mxu0 0.0
    %229 = vmatpush1.msra.mxu0 0.0
    %230 = vmatprep.subr.mxu0 0.0
    %231 = vmatpush1.msra.mxu0 0.0
    %232 = vmatprep.subr.mxu0 0.0
    %233 = vmatpush1.msra.mxu0 0.0
    %234 = vmatprep.subr.mxu0 0.0
    %235 = vmatpush1.msra.mxu0 0.0
    %236 = vmatprep.subr.mxu0 0.0
    %237 = vmatpush1.msra.mxu0 0.0
    %238 = vmatprep.subr.mxu0 0.0
    %239 = vmatpush1.msra.mxu0 0.0
    %240 = vmatprep.subr.mxu0 0.0
    %241 = vmatpush1.msra.mxu0 0.0
    %242 = vmatprep.mubr.f32.mxu0 0.0
    %243 = vmatmul.mubr.f32.gmra.mrb[0].mxu0 %v154
    %v244 = vpop.f32.mrb[0].mxu0
    %v245 = vadd.f32 %v176, %v244
    %v246 = vpop.f32.mrb[0].mxu0
    %247 = vdwg.mxu0
    %v248 = vtanh.pop %v245
    %v249 = vmul.f32 %v248, %v248
    %250 = vadd.xlane.f32.xlu0 %v249
    %v251 = vpop.xlane.xlu0 %250
    %v252 = vrsqrt.pop %v251
    %v253 = vmul.f32 %v251, %v252
    %vm254 = vcmp.eq.f32.partialorder %v251, inf
    %v255 = vsel %vm254, %v251, %v253
    %vm256 = vcmp.eq.f32.partialorder %v251, 0.0
    %v257 = vand.u32 %v251, 2147483648
    %v258 = vsel %vm256, %v257, %v255
    %v259 = vmax.f32 %v258, 1e-12
    %v260 = vrcp.pop %v259
    %v261 = vmul.f32 1.0, %v260
    %v262 = vmul.f32 %v248, %v261
    %263 = vst [vmem:[#allocation8] sm:$0xff] %v262
    // Predicated region
    $region34: #{tpu_custom_call.1} parent=1 // pred_check
      _
    $region35: #{tpu_custom_call.1} parent=1 // pred_check_branch
      %265 = sbr.rel (0) target = $region37
    $region36: #{tpu_custom_call.1} parent=1 // pred_region
      %s267 = ssub.s32 128, 128
      %268 = vsyncadd [#allocation4], %s267
      %s270 = sshll.u32 [#allocation8], 4
      %s271 = int_to_ptr.vmem [resolvable:$true] %s270
      %273 = dma.vmem_to_hbm [thread:$0]  %s271, 128, %s5, [#allocation4]
    $region37: #{tpu_custom_call.1} parent=1 // pred_fallthru
      _
    // Predicated region
    $region38: #{tpu_custom_call.1} parent=1 // pred_check
      _
    $region39: #{tpu_custom_call.1} parent=1 // pred_check_branch
      %275 = sbr.rel (0) target = $region41
    $region40: #{tpu_custom_call.1} parent=1 // pred_region
      %276 = dma.done [#allocation4], 128
    $region41: #{tpu_custom_call.1} parent=1 // pred_fallthru
      _
    %277 = vsyncpa [#allocation3], 1
    %278 = vsyncpa [#allocation6], 1
    %279 = vsyncpa [#allocation4], 1

</llo_original>
